<compile_context>
chip_gen: v7x
topology: tpu7x:2x2x1
jax: 0.10.0
libtpu: 0.0.40
codegen_flags: <defaults>
</compile_context>

<pallas_src>
import jax
import jax.numpy as jnp
from jax.experimental import pallas as pl
from jax.experimental.pallas import tpu as pltpu


def _round_up(a, m):
    return (a + m - 1) // m * m


def _pick_col_tile(dp, pref):
    # dp is a multiple of 128; return the largest tile <= pref that divides dp.
    if dp <= pref:
        return dp
    for t in (pref, 1024, 768, 512, 384, 256, 128):
        if t <= pref and dp % t == 0:
            return t
    return 128  # always divides dp (dp % 128 == 0)


def _fused_rowtile_kernel(x_ref, wt_ref, b_ref, o_ref):
    # Full-width path. Grid: (row tile i,)
    #   x_ref:  (TM, D)   rows of x
    #   wt_ref: (D, D)    folded weight, (in, out) layout  -> plain x @ W'
    #   b_ref:  (1, D)    folded bias
    #   o_ref:  (TM, D)   output tile
    acc = jnp.dot(x_ref[...], wt_ref[...], preferred_element_type=jnp.float32)
    o_ref[...] = (acc + b_ref[...].astype(jnp.float32)).astype(o_ref.dtype)


def _fused_tiled_kernel(x_ref, wt_ref, b_ref, o_ref, acc_ref):
    # Large-D path. Grid: (row tile i, output-column tile j, contraction tile k)
    #   x_ref:  (TM, TK)   rows of x, contraction slice k
    #   wt_ref: (TK, TN)   folded weight (in, out) layout, tile (k, j)
    #   b_ref:  (1,  TN)   folded bias slice j
    #   o_ref:  (TM, TN)   output tile (i, j)
    #   acc_ref:(TM, TN)   f32 accumulator scratch (persists across k)
    k = pl.program_id(2)

    @pl.when(k == 0)
    def _():
        acc_ref[...] = jnp.zeros_like(acc_ref)

    acc_ref[...] += jnp.dot(x_ref[...], wt_ref[...],
                            preferred_element_type=jnp.float32)

    @pl.when(k == pl.num_programs(2) - 1)
    def _():
        o_ref[...] = (acc_ref[...] + b_ref[...].astype(jnp.float32)
                      ).astype(o_ref.dtype)


def skip_connection_head(x, w, b, gates, *, row_tile=1024, col_tile=512,
                         full_width_limit=1024):
    """x: (..., D). w: (D, D) PyTorch-layout Linear weight (out, in).
    b: (D,), gates: (D,). Returns same shape/dtype as x (eval-mode forward)."""
    orig_shape = x.shape
    D = orig_shape[-1]
    x2 = x.reshape(-1, D)
    N = x2.shape[0]

    # Fold gate + residual into the weight/bias (tiny D^2 / D wrapper ops):
    #   out = (x @ W.T + b) * g + x = x @ (W * g[:,None] + I).T + b * g
    g = jax.nn.sigmoid(gates.astype(jnp.float32))
    wt = (w.astype(jnp.float32) * g[:, None]
          + jnp.eye(D, dtype=jnp.float32)).T.astype(x.dtype)   # (in, out)
    bf = (b.astype(jnp.float32) * g).reshape(1, D)              # f32 bias

    # Row tile: multiple of 8, or the full row count when it already fits.
    TM = N if N <= row_tile else _round_up(row_tile, 8)

    cparams = dict(vmem_limit_bytes=48 * 1024 * 1024)

    if D <= full_width_limit:
        # Single full-width tile: no k axis, no accumulator, weight DMA is
        # constant-index (fetched once), x read exactly once.
        grid = (pl.cdiv(N, TM),)
        out = pl.pallas_call(
            _fused_rowtile_kernel,
            out_shape=jax.ShapeDtypeStruct((N, D), x2.dtype),
            grid_spec=pltpu.PrefetchScalarGridSpec(
                num_scalar_prefetch=0,
                grid=grid,
                in_specs=[
                    pl.BlockSpec((TM, D), lambda i: (i, 0)),   # x rows
                    pl.BlockSpec((D, D), lambda i: (0, 0)),    # folded W'.T
                    pl.BlockSpec((1, D), lambda i: (0, 0)),    # folded bias
                ],
                out_specs=pl.BlockSpec((TM, D), lambda i: (i, 0)),
            ),
            compiler_params=pltpu.CompilerParams(
                dimension_semantics=("parallel",), **cparams),
        )(x2, wt, bf)
        return out.reshape(orig_shape)

    # Large-D fallback: tile the output columns (j) and contraction (k).
    Dp = _round_up(D, 128)
    if Dp != D:
        # Contraction-dim padding of x MUST be zero-filled (garbage * 0 rule
        # does not hold for NaN/Inf); weight/bias padding likewise.
        x2p = jnp.zeros((N, Dp), x2.dtype).at[:, :D].set(x2)
        wtp = jnp.zeros((Dp, Dp), wt.dtype).at[:D, :D].set(wt)
        bfp = jnp.zeros((1, Dp), bf.dtype).at[:, :D].set(bf)
    else:
        x2p, wtp, bfp = x2, wt, bf

    TN = TK = _pick_col_tile(Dp, col_tile)
    grid = (pl.cdiv(N, TM), Dp // TN, Dp // TK)

    out = pl.pallas_call(
        _fused_tiled_kernel,
        out_shape=jax.ShapeDtypeStruct((N, Dp), x2.dtype),
        grid_spec=pltpu.PrefetchScalarGridSpec(
            num_scalar_prefetch=0,
            grid=grid,
            in_specs=[
                pl.BlockSpec((TM, TK), lambda i, j, k: (i, k)),   # x (LHS)
                pl.BlockSpec((TK, TN), lambda i, j, k: (k, j)),   # folded W'.T
                pl.BlockSpec((1, TN), lambda i, j, k: (0, j)),    # folded bias
            ],
            out_specs=pl.BlockSpec((TM, TN), lambda i, j, k: (i, j)),
            scratch_shapes=[pltpu.VMEM((TM, TN), jnp.float32)],
        ),
        compiler_params=pltpu.CompilerParams(
            dimension_semantics=("parallel", "parallel", "arbitrary"),
            **cparams),
    )(x2p, wtp, bfp)

    return out[:, :D].reshape(orig_shape)


def _reference(x, w, b, gates):
    # plain-JAX reference of the PyTorch forward (eval mode)
    y = jnp.einsum("...d,ed->...e", x, w,
                   precision=jax.lax.Precision.HIGHEST) + b
    return y * jax.nn.sigmoid(gates) + x


if __name__ == "__main__":
    key = jax.random.PRNGKey(0)

    def make_case(k, B, S, D):
        kx, kw, kb = jax.random.split(k, 3)
        x = jax.random.normal(kx, (B, S, D), dtype=jnp.float32)
        bound = 1.0 / float(D) ** 0.5
        w = jax.random.uniform(kw, (D, D), minval=-bound, maxval=bound,
                               dtype=jnp.float32)
        b = jax.random.uniform(kb, (D,), minval=-bound, maxval=bound,
                               dtype=jnp.float32)
        gates = jnp.full((D,), -4.0, dtype=jnp.float32)  # reset_parameters()
        return x, w, b, gates

    k1, k2, k3 = jax.random.split(key, 3)

    # Production-like small case (transformer_output_dim = 32), full-width path.
    x, w, b, gates = make_case(k1, 2, 8, 32)
    out = jax.block_until_ready(skip_connection_head(x, w, b, gates))
    ref = _reference(x, w, b, gates)
    assert out.shape == x.shape and out.dtype == x.dtype
    assert jnp.allclose(out, ref, atol=2e-3, rtol=2e-3), "mismatch (small case)"

    # Ragged row count: N = 600 not a multiple of the 512-row tile (masked
    # writeback of the partial last row block, no wrapper pad copy).
    x, w, b, gates = make_case(k2, 3, 200, 32)
    out = jax.block_until_ready(skip_connection_head(x, w, b, gates, row_tile=512))
    ref = _reference(x, w, b, gates)
    assert jnp.allclose(out, ref, atol=2e-3, rtol=2e-3), "mismatch (ragged rows)"

    # Exercise the j/k-tiled accumulator path (forced via small full_width_limit).
    x, w, b, gates = make_case(k3, 2, 40, 256)
    out = jax.block_until_ready(
        skip_connection_head(x, w, b, gates, full_width_limit=128, col_tile=128))
    ref = _reference(x, w, b, gates)
    assert jnp.allclose(out, ref, atol=2e-3, rtol=2e-3), "mismatch (tiled case)"

    # TODO(synk): dropout / skip_dropout are identity in eval mode; training-mode
    # stochastic dropout is not implemented here.

    print("KERNEL_OK")
</pallas_src>

<mosaic_0001>
module attributes {stable_mosaic.version = 11 : i64} {
  func.func @_fused_rowtile_kernel(%arg0: i32, %arg1: memref<16x32xf32, #tpu.memory_space<vmem>>, %arg2: memref<32x32xf32, #tpu.memory_space<vmem>>, %arg3: memref<1x32xf32, #tpu.memory_space<vmem>>, %arg4: memref<16x32xf32, #tpu.memory_space<vmem>>) attributes {dimension_semantics = [#tpu.dimension_semantics<parallel>], iteration_bounds = array<i64: 1>, scalar_prefetch = 0 : i64, scratch_operands = 0 : i64, tpu.core_type = #tpu.core_type<tc>, window_params = [{transform_indices = @transform_0, window_bounds = array<i64: 16, 32>}, {pipeline_mode = #tpu.pipeline_mode<synchronous>, transform_indices = @transform_1, window_bounds = array<i64: 32, 32>}, {pipeline_mode = #tpu.pipeline_mode<synchronous>, transform_indices = @transform_2, window_bounds = array<i64: 1, 32>}, {transform_indices = @transform_3, window_bounds = array<i64: 16, 32>}]} {
    %c0 = arith.constant 0 : index
    %c0_0 = arith.constant 0 : index
    %0 = vector.load %arg1[%c0, %c0_0] : memref<16x32xf32, #tpu.memory_space<vmem>>, vector<16x32xf32>
    %c0_1 = arith.constant 0 : index
    %c0_2 = arith.constant 0 : index
    %1 = vector.load %arg2[%c0_1, %c0_2] : memref<32x32xf32, #tpu.memory_space<vmem>>, vector<32x32xf32>
    %cst = arith.constant dense<0.000000e+00> : vector<16x32xf32>
    %2 = tpu.matmul %0, %1, %cst {dimension_numbers = #tpu.dot_dimension_numbers<[1], [0], [0], [1], [0, 0, 1, 1], [], []>} : vector<16x32xf32>, vector<32x32xf32>, vector<16x32xf32> -> vector<16x32xf32>
    %c0_3 = arith.constant 0 : index
    %c0_4 = arith.constant 0 : index
    %3 = vector.load %arg3[%c0_3, %c0_4] : memref<1x32xf32, #tpu.memory_space<vmem>>, vector<1x32xf32>
    %4 = vector.broadcast %3 : vector<1x32xf32> to vector<16x32xf32>
    %5 = arith.addf %2, %4 : vector<16x32xf32>
    %c0_5 = arith.constant 0 : index
    %c0_6 = arith.constant 0 : index
    %6 = vector.load %arg4[%c0_5, %c0_6] : memref<16x32xf32, #tpu.memory_space<vmem>>, vector<16x32xf32>
    tpu.vector_store %arg4[%c0_5, %c0_6], %5 {strides = array<i32>} : memref<16x32xf32, #tpu.memory_space<vmem>>, vector<16x32xf32>,
    return
  }
  func.func @transform_0(%arg0: i32) -> (i32, i32) {
    %c0_i32 = arith.constant 0 : i32
    %c0_i32_0 = arith.constant 0 : i32
    return %arg0, %c0_i32 : i32, i32
  }
  func.func @transform_1(%arg0: i32) -> (i32, i32) {
    %c0_i32 = arith.constant 0 : i32
    %c0_i32_0 = arith.constant 0 : i32
    %c0_i32_1 = arith.constant 0 : i32
    return %c0_i32, %c0_i32_0 : i32, i32
  }
  func.func @transform_2(%arg0: i32) -> (i32, i32) {
    %c0_i32 = arith.constant 0 : i32
    %c0_i32_0 = arith.constant 0 : i32
    %c0_i32_1 = arith.constant 0 : i32
    return %c0_i32, %c0_i32_0 : i32, i32
  }
  func.func @transform_3(%arg0: i32) -> (i32, i32) {
    %c0_i32 = arith.constant 0 : i32
    %c0_i32_0 = arith.constant 0 : i32
    return %arg0, %c0_i32 : i32, i32
  }
}

</mosaic_0001>

<llo_original>
// kernel: tpu_custom_call.1
$region0: #{tpu_custom_call.1}
  #allocation0 [shape = 'u32[]', space=smem, size = 0x4, offset = 0x4, fixed_abs, tag = 'smem constant byte address 0x4 - core index']
  #allocation1 [shape = 'u32[144,128]{1,0:T(1,128)}', space=vmem, size = 0x12000, scoped, tag = 'internal scratch']
  %s0 = inlined_call_operand.hbm [shape: f32[16,32], index: 0, kind: input, shape index: {}]
  %s1 = inlined_call_operand.hbm [shape: f32[32,32], index: 1, kind: input, shape index: {}]
  %s2 = inlined_call_operand.vmem [shape: f32[1,32], index: 2, kind: input, shape index: {}]
  %s3 = inlined_call_operand.hbm [shape: f32[16,32], index: 3, kind: output, shape index: {}]
  %s4 = sld [smem:[#allocation0]]
  $region30: #{tpu_custom_call.1} parent=0
    _
  %s6 = ssub.s32 1, %s4
  %s7 = scalar_select 0, %s6, %s4
  $region1: #{tpu_custom_call.1} parent=0
    #allocation2 [shape = 'u8[8192]{0}', space=vmem, size = 0x2000, scoped, tag = 'input window, operand 0, single buffered']
    #allocation3 [shape = 's32[1]{0}', space=sflag, size = 0x4, scoped, tag = 'scoped memory for tpu_custom_call.1']
    #allocation4 [shape = 's32[1]{0}', space=sflag, size = 0x4, scoped, tag = 'scoped memory for tpu_custom_call.1']
    #allocation5 [shape = 'u8[16384]{0}', space=vmem, size = 0x4000, scoped, tag = 'input window, operand 1, single buffered']
    #allocation6 [shape = 's32[1]{0}', space=sflag, size = 0x4, scoped, tag = 'scoped memory for tpu_custom_call.1']
    #allocation7 [shape = 'u8[8192]{0}', space=vmem, size = 0x2000, scoped, tag = 'output window, operand 0, single buffered']
    %8 = vsyncpa [#allocation3], 0
    %9 = vsyncpa [#allocation6], 0
    %10 = vsyncpa [#allocation4], 0
    // Predicated region
    $region2: #{tpu_custom_call.1} parent=1 // pred_check
      _
    $region3: #{tpu_custom_call.1} parent=1 // pred_check_branch
      %12 = sbr.rel (0) target = $region5
    $region4: #{tpu_custom_call.1} parent=1 // pred_region
      %s14 = ssub.s32 256, 256
      %15 = vsyncadd [#allocation3], %s14
      %s16 = sshll.u32 [#allocation2], 4
      %s17 = int_to_ptr.vmem [resolvable:$true] %s16
      %22 = dma.hbm_to_vmem [thread:$0]  %s0, 256, %s17, [#allocation3], 128, 128, 8
    $region5: #{tpu_custom_call.1} parent=1 // pred_fallthru
      _
    // Predicated region
    $region6: #{tpu_custom_call.1} parent=1 // pred_check
      _
    $region7: #{tpu_custom_call.1} parent=1 // pred_check_branch
      %24 = sbr.rel (0) target = $region9
    $region8: #{tpu_custom_call.1} parent=1 // pred_region
      %s26 = ssub.s32 512, 512
      %27 = vsyncadd [#allocation6], %s26
      %s28 = sshll.u32 [#allocation5], 4
      %s29 = int_to_ptr.vmem [resolvable:$true] %s28
      %34 = dma.hbm_to_vmem [thread:$0]  %s1, 512, %s29, [#allocation6], 128, 128, 8
    $region9: #{tpu_custom_call.1} parent=1 // pred_fallthru
      _
    // Predicated region
    $region10: #{tpu_custom_call.1} parent=1 // pred_check
      _
    $region11: #{tpu_custom_call.1} parent=1 // pred_check_branch
      %36 = sbr.rel (0) target = $region13
    $region12: #{tpu_custom_call.1} parent=1 // pred_region
      _
    $region13: #{tpu_custom_call.1} parent=1 // pred_fallthru
      _
    // Predicated region
    $region14: #{tpu_custom_call.1} parent=1 // pred_check
      _
    $region15: #{tpu_custom_call.1} parent=1 // pred_check_branch
      %38 = sbr.rel (0) target = $region17
    $region16: #{tpu_custom_call.1} parent=1 // pred_region
      %39 = dma.done [#allocation3], 256
    $region17: #{tpu_custom_call.1} parent=1 // pred_fallthru
      _
    // Predicated region
    $region18: #{tpu_custom_call.1} parent=1 // pred_check
      _
    $region19: #{tpu_custom_call.1} parent=1 // pred_check_branch
      %41 = sbr.rel (0) target = $region21
    $region20: #{tpu_custom_call.1} parent=1 // pred_region
      %42 = dma.done [#allocation6], 512
    $region21: #{tpu_custom_call.1} parent=1 // pred_fallthru
      _
    %v43 = vld [vmem:[#allocation2] sm:$0xff]
    %v44 = vld [vmem:[#allocation2 + $0x8] sm:$0xff]
    %v45 = vld [vmem:[#allocation5] sm:$0xff]
    %v46 = vld [vmem:[#allocation5 + $0x8] sm:$0xff]
    %v47 = vld [vmem:[#allocation5 + $0x10] sm:$0xff]
    %v48 = vld [vmem:[#allocation5 + $0x18] sm:$0xff]
    %v49 = vld [vmem:[%s2] sm:$0x1]
    %v51 = vlaneseq
    %v52 = vshrl.u32 %v51, 7
    %v53 = vsub.s32 0, %v52
    %v54 = vrot.slane %v49, %v53
    %vm56 = vcmask 261120
    %v58 = vsel %vm56, %v43, 0
    %v61 = vsel %vm56, %v44, 0
    %63 = vmatprep.subr.mxu0 0.0
    %64 = vmatpush1.msra.mxu0 %v45
    %65 = vmatprep.subr.mxu0 0.0
    %66 = vmatpush1.msra.mxu0 %v46
    %67 = vmatprep.subr.mxu0 0.0
    %68 = vmatpush1.msra.mxu0 %v47
    %69 = vmatprep.subr.mxu0 0.0
    %70 = vmatpush1.msra.mxu0 %v48
    %71 = vmatprep.subr.mxu0 0.0
    %72 = vmatpush1.msra.mxu0 0.0
    %73 = vmatprep.subr.mxu0 0.0
    %74 = vmatpush1.msra.mxu0 0.0
    %75 = vmatprep.subr.mxu0 0.0
    %76 = vmatpush1.msra.mxu0 0.0
    %77 = vmatprep.subr.mxu0 0.0
    %78 = vmatpush1.msra.mxu0 0.0
    %79 = vmatprep.subr.mxu0 0.0
    %80 = vmatpush1.msra.mxu0 0.0
    %81 = vmatprep.subr.mxu0 0.0
    %82 = vmatpush1.msra.mxu0 0.0
    %83 = vmatprep.subr.mxu0 0.0
    %84 = vmatpush1.msra.mxu0 0.0
    %85 = vmatprep.subr.mxu0 0.0
    %86 = vmatpush1.msra.mxu0 0.0
    %87 = vmatprep.subr.mxu0 0.0
    %88 = vmatpush1.msra.mxu0 0.0
    %89 = vmatprep.subr.mxu0 0.0
    %90 = vmatpush1.msra.mxu0 0.0
    %91 = vmatprep.subr.mxu0 0.0
    %92 = vmatpush1.msra.mxu0 0.0
    %93 = vmatprep.subr.mxu0 0.0
    %94 = vmatpush1.msra.mxu0 0.0
    %95 = vmatprep.subr.mxu0 0.0
    %96 = vmatpush1.msra.mxu0 0.0
    %97 = vmatprep.subr.mxu0 0.0
    %98 = vmatpush1.msra.mxu0 0.0
    %99 = vmatprep.subr.mxu0 0.0
    %100 = vmatpush1.msra.mxu0 0.0
    %101 = vmatprep.subr.mxu0 0.0
    %102 = vmatpush1.msra.mxu0 0.0
    %103 = vmatprep.subr.mxu0 0.0
    %104 = vmatpush1.msra.mxu0 0.0
    %105 = vmatprep.subr.mxu0 0.0
    %106 = vmatpush1.msra.mxu0 0.0
    %107 = vmatprep.subr.mxu0 0.0
    %108 = vmatpush1.msra.mxu0 0.0
    %109 = vmatprep.subr.mxu0 0.0
    %110 = vmatpush1.msra.mxu0 0.0
    %111 = vmatprep.subr.mxu0 0.0
    %112 = vmatpush1.msra.mxu0 0.0
    %113 = vmatprep.subr.mxu0 0.0
    %114 = vmatpush1.msra.mxu0 0.0
    %115 = vmatprep.subr.mxu0 0.0
    %116 = vmatpush1.msra.mxu0 0.0
    %117 = vmatprep.subr.mxu0 0.0
    %118 = vmatpush1.msra.mxu0 0.0
    %119 = vmatprep.subr.mxu0 0.0
    %120 = vmatpush1.msra.mxu0 0.0
    %121 = vmatprep.subr.mxu0 0.0
    %122 = vmatpush1.msra.mxu0 0.0
    %123 = vmatprep.subr.mxu0 0.0
    %124 = vmatpush1.msra.mxu0 0.0
    %125 = vmatprep.subr.mxu0 0.0
    %126 = vmatpush1.msra.mxu0 0.0
    %127 = vmatprep.mubr.f32.mxu0 0.0
    %128 = vmatmul.mubr.f32.gmra.mrb[0].mxu0 %v58
    %v129 = vpop.f32.mrb[0].mxu0
    %v130 = vadd.f32 %v54, %v129
    %v131 = vpop.f32.mrb[0].mxu0
    %132 = vmatprep.mubr.f32.mxu0 0.0
    %133 = vmatmul.mubr.f32.gmra.mrb[0].mxu0 %v61
    %v134 = vpop.f32.mrb[0].mxu0
    %v135 = vadd.f32 %v54, %v134
    %v136 = vpop.f32.mrb[0].mxu0
    %137 = vdwg.mxu0
    %138 = vst.msk [vmem:[#allocation7] sm:$0xff] %vm56, %v130
    %139 = vst.msk [vmem:[#allocation7 + $0x8] sm:$0xff] %vm56, %v135
    // Predicated region
    $region22: #{tpu_custom_call.1} parent=1 // pred_check
      _
    $region23: #{tpu_custom_call.1} parent=1 // pred_check_branch
      %141 = sbr.rel (0) target = $region25
    $region24: #{tpu_custom_call.1} parent=1 // pred_region
      %s143 = ssub.s32 256, 256
      %144 = vsyncadd [#allocation4], %s143
      %s145 = sshll.u32 [#allocation7], 4
      %s146 = int_to_ptr.vmem [resolvable:$true] %s145
      %151 = dma.vmem_to_hbm [thread:$0]  %s146, 256, %s3, [#allocation4], 128, 128, 8
    $region25: #{tpu_custom_call.1} parent=1 // pred_fallthru
      _
    // Predicated region
    $region26: #{tpu_custom_call.1} parent=1 // pred_check
      _
    $region27: #{tpu_custom_call.1} parent=1 // pred_check_branch
      %153 = sbr.rel (0) target = $region29
    $region28: #{tpu_custom_call.1} parent=1 // pred_region
      %154 = dma.done [#allocation4], 256
    $region29: #{tpu_custom_call.1} parent=1 // pred_fallthru
      _
    %155 = vsyncpa [#allocation3], 1
    %156 = vsyncpa [#allocation6], 1
    %157 = vsyncpa [#allocation4], 1

</llo_original>
